<compile_context>
chip_gen: v7x
topology: tpu7x:2x2x1
jax: 0.10.0
libtpu: 0.0.40
codegen_flags: <defaults>
</compile_context>

<pallas_src>
import functools

import jax
import jax.numpy as jnp
from jax import lax
from jax.experimental import pallas as pl
from jax.experimental.pallas import tpu as pltpu


# 2-D dot_general dimension numbers (no batch dims):
#   NT: contract the minor dim of both operands  -> (lhs_rows, rhs_rows)
#   TN: contract lhs major dim with rhs minor dim -> (lhs_cols, rhs_rows)
_NT_DIMS = (((1,), (1,)), ((), ()))
_TN_DIMS = (((0,), (1,)), ((), ()))


def _dynamics_kernel(s_ref, a_ref, w1s_ref, w1a_ref, w2_ref, w3_ref,
                     b12_ref, b3_ref, out_ref, *, h1):
    """Batch-major HBM I/O tiles, feature-major (lane-dense) internal compute.

    s_ref:   (TB, S)      states tile, batch-major (as stored in HBM)
    a_ref:   (TB, A)      actions tile, batch-major
    w1s_ref: (H1, S)      layer-1 weight, state half   (resident)
    w1a_ref: (H1, A)      layer-1 weight, action half  (resident)
    w2_ref:  (H2, H1)     layer-2 weight               (resident)
    w3_ref:  (S, H2)      output weight                (resident)
    b12_ref: (H1+H2, 1)   hidden biases, feature-major column
    b3_ref:  (1, S)       output bias, lane-major row
    out_ref: (TB, S)      next-state tile, batch-major
    """
    s = s_ref[...]                                       # (TB, S)
    a = jnp.clip(a_ref[...], -1.0, 1.0)                  # (TB, A) clamped actions

    b12 = b12_ref[...]                                   # (H1+H2, 1)
    b1 = b12[:h1, :]
    b2 = b12[h1:, :]

    # Layer 1: contract the feature dims of the batch-major tiles directly
    # (NT dim numbers) -> feature-major (H1, TB) with batch on the lane axis.
    # No wrapper concat, no in-kernel transpose; W1 is split so no concat of
    # the state/action tiles is needed either.
    h = (lax.dot_general(w1s_ref[...], s, _NT_DIMS,
                         preferred_element_type=jnp.float32)
         + lax.dot_general(w1a_ref[...], a, _NT_DIMS,
                           preferred_element_type=jnp.float32)
         + b1)
    h = jnp.maximum(h, 0.0)                              # (H1, TB)

    # Layer 2: plain feature-major matmul (lane-dense).
    h = jnp.dot(w2_ref[...], h, preferred_element_type=jnp.float32) + b2
    h = jnp.maximum(h, 0.0)                              # (H2, TB)

    # Output layer, produced directly batch-major (TN dim numbers) so the
    # residual add and the store need no transpose / no wrapper pass.
    diff = lax.dot_general(h, w3_ref[...], _TN_DIMS,
                           preferred_element_type=jnp.float32)   # (TB, S)
    diff = diff + b3_ref[...]                            # (1, S) broadcast over rows

    out_ref[...] = jnp.clip(s + diff, -100.0, 100.0)     # (TB, S)


def _choose_tile_b(batch):
    """Pick (tile_b, padded_batch).

    Prefer large tiles (>= ~1 MB of I/O per grid step) to amortize the
    ~0.35 us per-grid-step overhead, while keeping grid >= 2 whenever the
    batch allows so both v7x TensorCores get work.  Batches that don't divide
    nicely are padded to a tile multiple (never one monolithic block).
    """
    for cand in (8192, 4096, 2048, 1024, 512, 256, 128):
        if batch % cand == 0 and batch // cand >= 2:
            return cand, batch
    if batch <= 128:
        return batch, batch        # tiny batch: one full-extent tile (grid=1)
    tile = min(8192, max(128, pl.next_power_of_2(pl.cdiv(batch, 2))))
    padded = pl.cdiv(batch, tile) * tile
    return tile, padded


def dynamics_forward(states, actions, params, *, tile_b=None):
    """states: (B, S) f32, actions: (B, A) f32 -> next_states: (B, S) f32."""
    B, S = states.shape
    B_a, A = actions.shape
    assert B_a == B
    w1s, w1a, w2t, w3t, b12, b3 = params
    H1, H2 = w1s.shape[0], w2t.shape[0]
    assert w1s.shape == (H1, S) and w1a.shape == (H1, A)
    assert w2t.shape == (H2, H1) and w3t.shape == (S, H2)
    assert b12.shape == (H1 + H2, 1) and b3.shape == (1, S)

    if tile_b is None:
        tile_b, padded_b = _choose_tile_b(B)
    else:
        padded_b = pl.cdiv(B, tile_b) * tile_b

    if padded_b != B:
        pad = padded_b - B
        states_in = jnp.pad(states, ((0, pad), (0, 0)))
        actions_in = jnp.pad(actions, ((0, pad), (0, 0)))
    else:
        states_in, actions_in = states, actions

    grid = (padded_b // tile_b,)
    kernel = functools.partial(_dynamics_kernel, h1=H1)

    out = pl.pallas_call(
        kernel,
        out_shape=jax.ShapeDtypeStruct((padded_b, S), jnp.float32),
        grid_spec=pltpu.PrefetchScalarGridSpec(
            num_scalar_prefetch=0,
            grid=grid,
            in_specs=[
                pl.BlockSpec((tile_b, S), lambda i: (i, 0)),    # states tile
                pl.BlockSpec((tile_b, A), lambda i: (i, 0)),    # actions tile
                pl.BlockSpec((H1, S), lambda i: (0, 0)),        # W1 state half (resident)
                pl.BlockSpec((H1, A), lambda i: (0, 0)),        # W1 action half (resident)
                pl.BlockSpec((H2, H1), lambda i: (0, 0)),       # W2^T (resident)
                pl.BlockSpec((S, H2), lambda i: (0, 0)),        # W3^T (resident)
                pl.BlockSpec((H1 + H2, 1), lambda i: (0, 0)),   # hidden biases (column)
                pl.BlockSpec((1, S), lambda i: (0, 0)),         # output bias (row)
            ],
            out_specs=pl.BlockSpec((tile_b, S), lambda i: (i, 0)),
        ),
        compiler_params=pltpu.CompilerParams(
            # Batch axis is independent -> shards across v7x's two TensorCores.
            dimension_semantics=("parallel",),
            # Footprint is ~8 MB at tile_b=8192 (I/O double-buffers + activation
            # temporaries); 32 MiB gives ample headroom on every generation.
            vmem_limit_bytes=32 * 1024 * 1024,
        ),
    )(states_in, actions_in, w1s, w1a, w2t, w3t, b12, b3)

    return out if padded_b == B else out[:B]


def init_params(key, state_dim, action_dim, hidden_dims):
    """Synthetic init, already in the kernel's (out, in) weight layout.

    Weights ~ truncated normal (as in the module).  The module inits biases to
    zero; small nonzero values are used here so the bias paths are exercised
    by the correctness check.
    """
    assert len(hidden_dims) == 2
    dims = [state_dim + action_dim] + list(hidden_dims) + [state_dim]
    keys = jax.random.split(key, 5)
    weights = []
    for k, (din, dout) in zip(keys[:3], zip(dims[:-1], dims[1:])):
        std = 1.0 / jnp.sqrt(jnp.float32(din))
        w = jax.random.truncated_normal(k, -2.0, 2.0, (dout, din), jnp.float32) * std
        weights.append(w)                                   # (out, in) == W^T
    w1t, w2t, w3t = weights
    w1s, w1a = w1t[:, :state_dim], w1t[:, state_dim:]
    h1, h2 = hidden_dims
    b12 = 0.01 * jax.random.normal(keys[3], (h1 + h2, 1), jnp.float32)
    b3 = 0.01 * jax.random.normal(keys[4], (1, state_dim), jnp.float32)
    return (w1s, w1a, w2t, w3t, b12, b3)


def dynamics_ref(states, actions, params):
    """Pure-JAX (batch-major) reference for the correctness check."""
    w1s, w1a, w2t, w3t, b12, b3 = params
    h1 = w1s.shape[0]
    w1t = jnp.concatenate([w1s, w1a], axis=1)
    b1 = b12[:h1, 0]
    b2 = b12[h1:, 0]
    x = jnp.concatenate([states, jnp.clip(actions, -1.0, 1.0)], axis=-1)
    h = jax.nn.relu(x @ w1t.T + b1)
    h = jax.nn.relu(h @ w2t.T + b2)
    diff = h @ w3t.T + b3[0]
    return jnp.clip(states + diff, -100.0, 100.0)


if __name__ == "__main__":
    S, A = 16, 8
    hidden_dims = [32, 32]

    key = jax.random.PRNGKey(0)
    k_p, k_s, k_a, k_s2, k_a2, k_s3, k_a3 = jax.random.split(key, 7)
    params = init_params(k_p, S, A, hidden_dims)

    # Small, module-consistent demo shape: single full-extent tile (grid=(1,)).
    B = 64
    states = jax.random.normal(k_s, (B, S), jnp.float32)
    actions = 2.0 * jax.random.normal(k_a, (B, A), jnp.float32)   # exercises clamp
    out = jax.block_until_ready(dynamics_forward(states, actions, params))
    ref = dynamics_ref(states, actions, params)
    assert out.shape == (B, S) and out.dtype == jnp.float32
    assert jnp.allclose(out, ref, atol=1e-4, rtol=1e-4)

    # Tiled path: 128-row batch tiles, grid=(2,) (both v7x TensorCores busy).
    B2 = 256
    states2 = jax.random.normal(k_s2, (B2, S), jnp.float32)
    actions2 = 2.0 * jax.random.normal(k_a2, (B2, A), jnp.float32)
    out2 = jax.block_until_ready(dynamics_forward(states2, actions2, params))
    assert jnp.allclose(out2, dynamics_ref(states2, actions2, params),
                        atol=1e-4, rtol=1e-4)

    # Awkward batch: padded to a tile multiple (no monolithic-block fallback).
    B3 = 200
    states3 = jax.random.normal(k_s3, (B3, S), jnp.float32)
    actions3 = 2.0 * jax.random.normal(k_a3, (B3, A), jnp.float32)
    out3 = jax.block_until_ready(dynamics_forward(states3, actions3, params))
    assert out3.shape == (B3, S)
    assert jnp.allclose(out3, dynamics_ref(states3, actions3, params),
                        atol=1e-4, rtol=1e-4)

    print("KERNEL_OK")
</pallas_src>

<mosaic_0001>
module attributes {stable_mosaic.version = 11 : i64} {
  func.func @_dynamics_kernel(%arg0: i32, %arg1: memref<64x16xf32, #tpu.memory_space<vmem>>, %arg2: memref<64x8xf32, #tpu.memory_space<vmem>>, %arg3: memref<32x16xf32, #tpu.memory_space<vmem>>, %arg4: memref<32x8xf32, #tpu.memory_space<vmem>>, %arg5: memref<32x32xf32, #tpu.memory_space<vmem>>, %arg6: memref<16x32xf32, #tpu.memory_space<vmem>>, %arg7: memref<64x1xf32, #tpu.memory_space<vmem>>, %arg8: memref<1x16xf32, #tpu.memory_space<vmem>>, %arg9: memref<64x16xf32, #tpu.memory_space<vmem>>) attributes {dimension_semantics = [#tpu.dimension_semantics<parallel>], iteration_bounds = array<i64: 1>, scalar_prefetch = 0 : i64, scratch_operands = 0 : i64, tpu.core_type = #tpu.core_type<tc>, window_params = [{transform_indices = @transform_0, window_bounds = array<i64: 64, 16>}, {transform_indices = @transform_1, window_bounds = array<i64: 64, 8>}, {pipeline_mode = #tpu.pipeline_mode<synchronous>, transform_indices = @transform_2, window_bounds = array<i64: 32, 16>}, {pipeline_mode = #tpu.pipeline_mode<synchronous>, transform_indices = @transform_3, window_bounds = array<i64: 32, 8>}, {pipeline_mode = #tpu.pipeline_mode<synchronous>, transform_indices = @transform_4, window_bounds = array<i64: 32, 32>}, {pipeline_mode = #tpu.pipeline_mode<synchronous>, transform_indices = @transform_5, window_bounds = array<i64: 16, 32>}, {pipeline_mode = #tpu.pipeline_mode<synchronous>, transform_indices = @transform_6, window_bounds = array<i64: 64, 1>}, {pipeline_mode = #tpu.pipeline_mode<synchronous>, transform_indices = @transform_7, window_bounds = array<i64: 1, 16>}, {transform_indices = @transform_8, window_bounds = array<i64: 64, 16>}]} {
    %c0 = arith.constant 0 : index
    %c0_0 = arith.constant 0 : index
    %0 = vector.load %arg1[%c0, %c0_0] : memref<64x16xf32, #tpu.memory_space<vmem>>, vector<64x16xf32>
    %c0_1 = arith.constant 0 : index
    %c0_2 = arith.constant 0 : index
    %1 = vector.load %arg2[%c0_1, %c0_2] : memref<64x8xf32, #tpu.memory_space<vmem>>, vector<64x8xf32>
    %cst = arith.constant -1.000000e+00 : f32
    %cst_3 = arith.constant 1.000000e+00 : f32
    %2 = vector.broadcast %cst : f32 to vector<64x8xf32>
    %3 = arith.maximumf %2, %1 : vector<64x8xf32>
    %4 = vector.broadcast %cst_3 : f32 to vector<64x8xf32>
    %5 = arith.minimumf %4, %3 : vector<64x8xf32>
    %c0_4 = arith.constant 0 : index
    %c0_5 = arith.constant 0 : index
    %6 = vector.load %arg7[%c0_4, %c0_5] : memref<64x1xf32, #tpu.memory_space<vmem>>, vector<64x1xf32>
    %7 = vector.extract_strided_slice %6 {offsets = [0, 0], sizes = [32, 1], strides = [1, 1]} : vector<64x1xf32> to vector<32x1xf32>
    %8 = vector.extract_strided_slice %6 {offsets = [32, 0], sizes = [32, 1], strides = [1, 1]} : vector<64x1xf32> to vector<32x1xf32>
    %c0_6 = arith.constant 0 : index
    %c0_7 = arith.constant 0 : index
    %9 = vector.load %arg3[%c0_6, %c0_7] : memref<32x16xf32, #tpu.memory_space<vmem>>, vector<32x16xf32>
    %cst_8 = arith.constant dense<0.000000e+00> : vector<32x64xf32>
    %10 = tpu.matmul %9, %0, %cst_8 {dimension_numbers = #tpu.dot_dimension_numbers<[1], [1], [0], [0], [0, 0, 1, 0], [], []>} : vector<32x16xf32>, vector<64x16xf32>, vector<32x64xf32> -> vector<32x64xf32>
    %c0_9 = arith.constant 0 : index
    %c0_10 = arith.constant 0 : index
    %11 = vector.load %arg4[%c0_9, %c0_10] : memref<32x8xf32, #tpu.memory_space<vmem>>, vector<32x8xf32>
    %cst_11 = arith.constant dense<0.000000e+00> : vector<32x64xf32>
    %12 = tpu.matmul %11, %5, %cst_11 {dimension_numbers = #tpu.dot_dimension_numbers<[1], [1], [0], [0], [0, 0, 1, 0], [], []>} : vector<32x8xf32>, vector<64x8xf32>, vector<32x64xf32> -> vector<32x64xf32>
    %13 = arith.addf %10, %12 : vector<32x64xf32>
    %14 = vector.broadcast %7 : vector<32x1xf32> to vector<32x64xf32>
    %15 = arith.addf %13, %14 : vector<32x64xf32>
    %cst_12 = arith.constant 0.000000e+00 : f32
    %16 = vector.broadcast %cst_12 : f32 to vector<32x64xf32>
    %17 = arith.maximumf %15, %16 : vector<32x64xf32>
    %c0_13 = arith.constant 0 : index
    %c0_14 = arith.constant 0 : index
    %18 = vector.load %arg5[%c0_13, %c0_14] : memref<32x32xf32, #tpu.memory_space<vmem>>, vector<32x32xf32>
    %cst_15 = arith.constant dense<0.000000e+00> : vector<32x64xf32>
    %19 = tpu.matmul %18, %17, %cst_15 {dimension_numbers = #tpu.dot_dimension_numbers<[1], [0], [0], [1], [0, 0, 1, 1], [], []>} : vector<32x32xf32>, vector<32x64xf32>, vector<32x64xf32> -> vector<32x64xf32>
    %20 = vector.broadcast %8 : vector<32x1xf32> to vector<32x64xf32>
    %21 = arith.addf %19, %20 : vector<32x64xf32>
    %cst_16 = arith.constant 0.000000e+00 : f32
    %22 = vector.broadcast %cst_16 : f32 to vector<32x64xf32>
    %23 = arith.maximumf %21, %22 : vector<32x64xf32>
    %c0_17 = arith.constant 0 : index
    %c0_18 = arith.constant 0 : index
    %24 = vector.load %arg6[%c0_17, %c0_18] : memref<16x32xf32, #tpu.memory_space<vmem>>, vector<16x32xf32>
    %cst_19 = arith.constant dense<0.000000e+00> : vector<64x16xf32>
    %25 = tpu.matmul %23, %24, %cst_19 {dimension_numbers = #tpu.dot_dimension_numbers<[0], [1], [1], [0], [0, 1, 1, 0], [], []>} : vector<32x64xf32>, vector<16x32xf32>, vector<64x16xf32> -> vector<64x16xf32>
    %c0_20 = arith.constant 0 : index
    %c0_21 = arith.constant 0 : index
    %26 = vector.load %arg8[%c0_20, %c0_21] : memref<1x16xf32, #tpu.memory_space<vmem>>, vector<1x16xf32>
    %27 = vector.broadcast %26 : vector<1x16xf32> to vector<64x16xf32>
    %28 = arith.addf %25, %27 : vector<64x16xf32>
    %29 = arith.addf %0, %28 : vector<64x16xf32>
    %cst_22 = arith.constant -1.000000e+02 : f32
    %cst_23 = arith.constant 1.000000e+02 : f32
    %30 = vector.broadcast %cst_22 : f32 to vector<64x16xf32>
    %31 = arith.maximumf %30, %29 : vector<64x16xf32>
    %32 = vector.broadcast %cst_23 : f32 to vector<64x16xf32>
    %33 = arith.minimumf %32, %31 : vector<64x16xf32>
    %c0_24 = arith.constant 0 : index
    %c0_25 = arith.constant 0 : index
    %34 = vector.load %arg9[%c0_24, %c0_25] : memref<64x16xf32, #tpu.memory_space<vmem>>, vector<64x16xf32>
    tpu.vector_store %arg9[%c0_24, %c0_25], %33 {strides = array<i32>} : memref<64x16xf32, #tpu.memory_space<vmem>>, vector<64x16xf32>,
    return
  }
  func.func @transform_0(%arg0: i32) -> (i32, i32) {
    %c0_i32 = arith.constant 0 : i32
    %c0_i32_0 = arith.constant 0 : i32
    return %arg0, %c0_i32 : i32, i32
  }
  func.func @transform_1(%arg0: i32) -> (i32, i32) {
    %c0_i32 = arith.constant 0 : i32
    %c0_i32_0 = arith.constant 0 : i32
    return %arg0, %c0_i32 : i32, i32
  }
  func.func @transform_2(%arg0: i32) -> (i32, i32) {
    %c0_i32 = arith.constant 0 : i32
    %c0_i32_0 = arith.constant 0 : i32
    %c0_i32_1 = arith.constant 0 : i32
    return %c0_i32, %c0_i32_0 : i32, i32
  }
  func.func @transform_3(%arg0: i32) -> (i32, i32) {
    %c0_i32 = arith.constant 0 : i32
    %c0_i32_0 = arith.constant 0 : i32
    %c0_i32_1 = arith.constant 0 : i32
    return %c0_i32, %c0_i32_0 : i32, i32
  }
  func.func @transform_4(%arg0: i32) -> (i32, i32) {
    %c0_i32 = arith.constant 0 : i32
    %c0_i32_0 = arith.constant 0 : i32
    %c0_i32_1 = arith.constant 0 : i32
    return %c0_i32, %c0_i32_0 : i32, i32
  }
  func.func @transform_5(%arg0: i32) -> (i32, i32) {
    %c0_i32 = arith.constant 0 : i32
    %c0_i32_0 = arith.constant 0 : i32
    %c0_i32_1 = arith.constant 0 : i32
    return %c0_i32, %c0_i32_0 : i32, i32
  }
  func.func @transform_6(%arg0: i32) -> (i32, i32) {
    %c0_i32 = arith.constant 0 : i32
    %c0_i32_0 = arith.constant 0 : i32
    %c0_i32_1 = arith.constant 0 : i32
    return %c0_i32, %c0_i32_0 : i32, i32
  }
  func.func @transform_7(%arg0: i32) -> (i32, i32) {
    %c0_i32 = arith.constant 0 : i32
    %c0_i32_0 = arith.constant 0 : i32
    %c0_i32_1 = arith.constant 0 : i32
    return %c0_i32, %c0_i32_0 : i32, i32
  }
  func.func @transform_8(%arg0: i32) -> (i32, i32) {
    %c0_i32 = arith.constant 0 : i32
    %c0_i32_0 = arith.constant 0 : i32
    return %arg0, %c0_i32 : i32, i32
  }
}

</mosaic_0001>

<llo_original>
// kernel: tpu_custom_call.1
$region0: #{tpu_custom_call.1}
  #allocation0 [shape = 'u32[]', space=smem, size = 0x4, offset = 0x4, fixed_abs, tag = 'smem constant byte address 0x4 - core index']
  #allocation1 [shape = 'u32[144,128]{1,0:T(1,128)}', space=vmem, size = 0x12000, scoped, tag = 'internal scratch']
  %s0 = inlined_call_operand.vmem [shape: f32[64,16], index: 0, kind: input, shape index: {}]
  %s1 = inlined_call_operand.vmem [shape: f32[64,8], index: 1, kind: input, shape index: {}]
  %s2 = inlined_call_operand.vmem [shape: f32[32,16], index: 2, kind: input, shape index: {}]
  %s3 = inlined_call_operand.vmem [shape: f32[32,8], index: 3, kind: input, shape index: {}]
  %s4 = inlined_call_operand.vmem [shape: f32[32,32], index: 4, kind: input, shape index: {}]
  %s5 = inlined_call_operand.vmem [shape: f32[16,32], index: 5, kind: input, shape index: {}]
  %s6 = inlined_call_operand.vmem [shape: f32[64,1], index: 6, kind: input, shape index: {}]
  %s7 = inlined_call_operand.vmem [shape: f32[1,16], index: 7, kind: input, shape index: {}]
  %s8 = inlined_call_operand.vmem [shape: f32[64,16], index: 8, kind: output, shape index: {}]
  %s9 = sld [smem:[#allocation0]]
  $region42: #{tpu_custom_call.1} parent=0
    _
  %s11 = ssub.s32 1, %s9
  %s12 = scalar_select 0, %s11, %s9
  // Predicated region
  $region2: #{tpu_custom_call.1} parent=0 // pred_check
    _
  $region3: #{tpu_custom_call.1} parent=0 // pred_check_branch
    %14 = sbr.rel (0) target = $region5
  $region4: #{tpu_custom_call.1} parent=0 // pred_region
    _
  $region5: #{tpu_custom_call.1} parent=0 // pred_fallthru
    _
  // Predicated region
  $region6: #{tpu_custom_call.1} parent=0 // pred_check
    _
  $region7: #{tpu_custom_call.1} parent=0 // pred_check_branch
    %16 = sbr.rel (0) target = $region9
  $region8: #{tpu_custom_call.1} parent=0 // pred_region
    _
  $region9: #{tpu_custom_call.1} parent=0 // pred_fallthru
    _
  // Predicated region
  $region10: #{tpu_custom_call.1} parent=0 // pred_check
    _
  $region11: #{tpu_custom_call.1} parent=0 // pred_check_branch
    %18 = sbr.rel (0) target = $region13
  $region12: #{tpu_custom_call.1} parent=0 // pred_region
    _
  $region13: #{tpu_custom_call.1} parent=0 // pred_fallthru
    _
  // Predicated region
  $region14: #{tpu_custom_call.1} parent=0 // pred_check
    _
  $region15: #{tpu_custom_call.1} parent=0 // pred_check_branch
    %20 = sbr.rel (0) target = $region17
  $region16: #{tpu_custom_call.1} parent=0 // pred_region
    _
  $region17: #{tpu_custom_call.1} parent=0 // pred_fallthru
    _
  // Predicated region
  $region18: #{tpu_custom_call.1} parent=0 // pred_check
    _
  $region19: #{tpu_custom_call.1} parent=0 // pred_check_branch
    %22 = sbr.rel (0) target = $region21
  $region20: #{tpu_custom_call.1} parent=0 // pred_region
    _
  $region21: #{tpu_custom_call.1} parent=0 // pred_fallthru
    _
  // Predicated region
  $region22: #{tpu_custom_call.1} parent=0 // pred_check
    _
  $region23: #{tpu_custom_call.1} parent=0 // pred_check_branch
    %24 = sbr.rel (0) target = $region25
  $region24: #{tpu_custom_call.1} parent=0 // pred_region
    _
  $region25: #{tpu_custom_call.1} parent=0 // pred_fallthru
    _
  // Predicated region
  $region26: #{tpu_custom_call.1} parent=0 // pred_check
    _
  $region27: #{tpu_custom_call.1} parent=0 // pred_check_branch
    %26 = sbr.rel (0) target = $region29
  $region28: #{tpu_custom_call.1} parent=0 // pred_region
    _
  $region29: #{tpu_custom_call.1} parent=0 // pred_fallthru
    _
  // Predicated region
  $region30: #{tpu_custom_call.1} parent=0 // pred_check
    _
  $region31: #{tpu_custom_call.1} parent=0 // pred_check_branch
    %28 = sbr.rel (0) target = $region33
  $region32: #{tpu_custom_call.1} parent=0 // pred_region
    _
  $region33: #{tpu_custom_call.1} parent=0 // pred_fallthru
    _
  %v29 = vld [vmem:[%s0] sm:$0xff]
  %v30 = vld [vmem:[%s0 + $0x8] sm:$0xff]
  %v31 = vld [vmem:[%s0 + $0x10] sm:$0xff]
  %v32 = vld [vmem:[%s0 + $0x18] sm:$0xff]
  %v33 = vld [vmem:[%s0 + $0x20] sm:$0xff]
  %v34 = vld [vmem:[%s0 + $0x28] sm:$0xff]
  %v35 = vld [vmem:[%s0 + $0x30] sm:$0xff]
  %v36 = vld [vmem:[%s0 + $0x38] sm:$0xff]
  %v37 = vld [vmem:[%s1] sm:$0xff]
  %v38 = vld [vmem:[%s1 + $0x8] sm:$0xff]
  %v39 = vld [vmem:[%s1 + $0x10] sm:$0xff]
  %v40 = vld [vmem:[%s1 + $0x18] sm:$0xff]
  %v41 = vld [vmem:[%s1 + $0x20] sm:$0xff]
  %v42 = vld [vmem:[%s1 + $0x28] sm:$0xff]
  %v43 = vld [vmem:[%s1 + $0x30] sm:$0xff]
  %v44 = vld [vmem:[%s1 + $0x38] sm:$0xff]
  %v45 = vmax.f32 %v37, -1.0
  %v46 = vmax.f32 %v38, -1.0
  %v47 = vmax.f32 %v39, -1.0
  %v48 = vmax.f32 %v40, -1.0
  %v49 = vmax.f32 %v41, -1.0
  %v50 = vmax.f32 %v42, -1.0
  %v51 = vmax.f32 %v43, -1.0
  %v52 = vmax.f32 %v44, -1.0
  %v53 = vmin.f32 %v45, 1.0
  %v54 = vmin.f32 %v46, 1.0
  %v55 = vmin.f32 %v47, 1.0
  %v56 = vmin.f32 %v48, 1.0
  %v57 = vmin.f32 %v49, 1.0
  %v58 = vmin.f32 %v50, 1.0
  %v59 = vmin.f32 %v51, 1.0
  %v60 = vmin.f32 %v52, 1.0
  %v61 = vld [vmem:[%s6] sm:$0xff]
  %v62 = vld [vmem:[%s6 + $0x8] sm:$0xff]
  %v63 = vld [vmem:[%s6 + $0x10] sm:$0xff]
  %v64 = vld [vmem:[%s6 + $0x18] sm:$0xff]
  %v65 = vld [vmem:[%s6 + $0x20] sm:$0xff]
  %v66 = vld [vmem:[%s6 + $0x28] sm:$0xff]
  %v67 = vld [vmem:[%s6 + $0x30] sm:$0xff]
  %v68 = vld [vmem:[%s6 + $0x38] sm:$0xff]
  %v69 = vld [vmem:[%s2] sm:$0xff]
  %v70 = vld [vmem:[%s2 + $0x8] sm:$0xff]
  %v71 = vld [vmem:[%s2 + $0x10] sm:$0xff]
  %v72 = vld [vmem:[%s2 + $0x18] sm:$0xff]
  %v73 = vld [vmem:[%s3] sm:$0xff]
  %v74 = vld [vmem:[%s3 + $0x8] sm:$0xff]
  %v75 = vld [vmem:[%s3 + $0x10] sm:$0xff]
  %v76 = vld [vmem:[%s3 + $0x18] sm:$0xff]
  %vm77 = vcmask 64512
  %v79 = vsel %vm77, %v73, 0
  %v82 = vsel %vm77, %v74, 0
  %v85 = vsel %vm77, %v75, 0
  %v88 = vsel %vm77, %v76, 0
  %v91 = vsel %vm77, %v53, 0
  %v94 = vsel %vm77, %v54, 0
  %v97 = vsel %vm77, %v55, 0
  %v100 = vsel %vm77, %v56, 0
  %v103 = vsel %vm77, %v57, 0
  %v106 = vsel %vm77, %v58, 0
  %v109 = vsel %vm77, %v59, 0
  %v112 = vsel %vm77, %v60, 0
  %114 = vmatprep.subr.mxu0 0.0
  %115 = vmatpush1.xpose.msra.mxu0 %v91
  %116 = vmatprep.subr.mxu0 0.0
  %117 = vmatpush1.xpose.msra.mxu0 %v94
  %118 = vmatprep.subr.mxu0 0.0
  %119 = vmatpush1.xpose.msra.mxu0 %v97
  %120 = vmatprep.subr.mxu0 0.0
  %121 = vmatpush1.xpose.msra.mxu0 %v100
  %122 = vmatprep.subr.mxu0 0.0
  %123 = vmatpush1.xpose.msra.mxu0 %v103
  %124 = vmatprep.subr.mxu0 0.0
  %125 = vmatpush1.xpose.msra.mxu0 %v106
  %126 = vmatprep.subr.mxu0 0.0
  %127 = vmatpush1.xpose.msra.mxu0 %v109
  %128 = vmatprep.subr.mxu0 0.0
  %129 = vmatpush1.xpose.msra.mxu0 %v112
  %130 = vmatprep.subr.mxu0 0.0
  %131 = vmatpush1.xpose.msra.mxu0 0.0
  %132 = vmatprep.subr.mxu0 0.0
  %133 = vmatpush1.xpose.msra.mxu0 0.0
  %134 = vmatprep.subr.mxu0 0.0
  %135 = vmatpush1.xpose.msra.mxu0 0.0
  %136 = vmatprep.subr.mxu0 0.0
  %137 = vmatpush1.xpose.msra.mxu0 0.0
  %138 = vmatprep.subr.mxu0 0.0
  %139 = vmatpush1.xpose.msra.mxu0 0.0
  %140 = vmatprep.subr.mxu0 0.0
  %141 = vmatpush1.xpose.msra.mxu0 0.0
  %142 = vmatprep.subr.mxu0 0.0
  %143 = vmatpush1.xpose.msra.mxu0 0.0
  %144 = vmatprep.subr.mxu0 0.0
  %145 = vmatpush1.xpose.msra.mxu0 0.0
  %146 = vmatprep.subr.mxu0 0.0
  %147 = vmatpush1.xpose.msra.mxu0 0.0
  %148 = vmatprep.subr.mxu0 0.0
  %149 = vmatpush1.xpose.msra.mxu0 0.0
  %150 = vmatprep.subr.mxu0 0.0
  %151 = vmatpush1.xpose.msra.mxu0 0.0
  %152 = vmatprep.subr.mxu0 0.0
  %153 = vmatpush1.xpose.msra.mxu0 0.0
  %154 = vmatprep.subr.mxu0 0.0
  %155 = vmatpush1.xpose.msra.mxu0 0.0
  %156 = vmatprep.subr.mxu0 0.0
  %157 = vmatpush1.xpose.msra.mxu0 0.0
  %158 = vmatprep.subr.mxu0 0.0
  %159 = vmatpush1.xpose.msra.mxu0 0.0
  %160 = vmatprep.subr.mxu0 0.0
  %161 = vmatpush1.xpose.msra.mxu0 0.0
  %162 = vmatprep.subr.mxu0 0.0
  %163 = vmatpush1.xpose.msra.mxu0 0.0
  %164 = vmatprep.subr.mxu0 0.0
  %165 = vmatpush1.xpose.msra.mxu0 0.0
  %166 = vmatprep.subr.mxu0 0.0
  %167 = vmatpush1.xpose.msra.mxu0 0.0
  %168 = vmatprep.subr.mxu0 0.0
  %169 = vmatpush1.xpose.msra.mxu0 0.0
  %170 = vmatprep.subr.mxu0 0.0
  %171 = vmatpush1.xpose.msra.mxu0 0.0
  %172 = vmatprep.subr.mxu0 0.0
  %173 = vmatpush1.xpose.msra.mxu0 0.0
  %174 = vmatprep.subr.mxu0 0.0
  %175 = vmatpush1.xpose.msra.mxu0 0.0
  %176 = vmatprep.subr.mxu0 0.0
  %177 = vmatpush1.xpose.msra.mxu0 0.0
  %178 = vmatprep.mubr.f32.mxu0 0.0
  %179 = vmatmul.mubr.f32.gmra.mrb[0].mxu0 %v79
  %v180 = vpop.f32.mrb[0].mxu0
  %v181 = vadd.f32 0.0, %v180
  %v182 = vpop.f32.mrb[0].mxu0
  %183 = vmatprep.mubr.f32.mxu0 0.0
  %184 = vmatmul.mubr.f32.gmra.mrb[0].mxu0 %v82
  %v185 = vpop.f32.mrb[0].mxu0
  %v186 = vadd.f32 0.0, %v185
  %v187 = vpop.f32.mrb[0].mxu0
  %188 = vmatprep.mubr.f32.mxu0 0.0
  %189 = vmatmul.mubr.f32.gmra.mrb[0].mxu0 %v85
  %v190 = vpop.f32.mrb[0].mxu0
  %v191 = vadd.f32 0.0, %v190
  %v192 = vpop.f32.mrb[0].mxu0
  %193 = vmatprep.mubr.f32.mxu0 0.0
  %194 = vmatmul.mubr.f32.gmra.mrb[0].mxu0 %v88
  %v195 = vpop.f32.mrb[0].mxu0
  %v196 = vadd.f32 0.0, %v195
  %v197 = vpop.f32.mrb[0].mxu0
  %198 = vdwg.mxu0
  %vm199 = vcmask 130048
  %v201 = vsel %vm199, %v69, 0
  %v204 = vsel %vm199, %v70, 0
  %v207 = vsel %vm199, %v71, 0
  %v210 = vsel %vm199, %v72, 0
  %v213 = vsel %vm199, %v29, 0
  %v216 = vsel %vm199, %v30, 0
  %v219 = vsel %vm199, %v31, 0
  %v222 = vsel %vm199, %v32, 0
  %v225 = vsel %vm199, %v33, 0
  %v228 = vsel %vm199, %v34, 0
  %v231 = vsel %vm199, %v35, 0
  %v234 = vsel %vm199, %v36, 0
  %236 = vmatprep.subr.mxu0 0.0
  %237 = vmatpush1.xpose.msra.mxu0 %v213
  %238 = vmatprep.subr.mxu0 0.0
  %239 = vmatpush1.xpose.msra.mxu0 %v216
  %240 = vmatprep.subr.mxu0 0.0
  %241 = vmatpush1.xpose.msra.mxu0 %v219
  %242 = vmatprep.subr.mxu0 0.0
  %243 = vmatpush1.xpose.msra.mxu0 %v222
  %244 = vmatprep.subr.mxu0 0.0
  %245 = vmatpush1.xpose.msra.mxu0 %v225
  %246 = vmatprep.subr.mxu0 0.0
  %247 = vmatpush1.xpose.msra.mxu0 %v228
  %248 = vmatprep.subr.mxu0 0.0
  %249 = vmatpush1.xpose.msra.mxu0 %v231
  %250 = vmatprep.subr.mxu0 0.0
  %251 = vmatpush1.xpose.msra.mxu0 %v234
  %252 = vmatprep.subr.mxu0 0.0
  %253 = vmatpush1.xpose.msra.mxu0 0.0
  %254 = vmatprep.subr.mxu0 0.0
  %255 = vmatpush1.xpose.msra.mxu0 0.0
  %256 = vmatprep.subr.mxu0 0.0
  %257 = vmatpush1.xpose.msra.mxu0 0.0
  %258 = vmatprep.subr.mxu0 0.0
  %259 = vmatpush1.xpose.msra.mxu0 0.0
  %260 = vmatprep.subr.mxu0 0.0
  %261 = vmatpush1.xpose.msra.mxu0 0.0
  %262 = vmatprep.subr.mxu0 0.0
  %263 = vmatpush1.xpose.msra.mxu0 0.0
  %264 = vmatprep.subr.mxu0 0.0
  %265 = vmatpush1.xpose.msra.mxu0 0.0
  %266 = vmatprep.subr.mxu0 0.0
  %267 = vmatpush1.xpose.msra.mxu0 0.0
  %268 = vmatprep.subr.mxu0 0.0
  %269 = vmatpush1.xpose.msra.mxu0 0.0
  %270 = vmatprep.subr.mxu0 0.0
  %271 = vmatpush1.xpose.msra.mxu0 0.0
  %272 = vmatprep.subr.mxu0 0.0
  %273 = vmatpush1.xpose.msra.mxu0 0.0
  %274 = vmatprep.subr.mxu0 0.0
  %275 = vmatpush1.xpose.msra.mxu0 0.0
  %276 = vmatprep.subr.mxu0 0.0
  %277 = vmatpush1.xpose.msra.mxu0 0.0
  %278 = vmatprep.subr.mxu0 0.0
  %279 = vmatpush1.xpose.msra.mxu0 0.0
  %280 = vmatprep.subr.mxu0 0.0
  %281 = vmatpush1.xpose.msra.mxu0 0.0
  %282 = vmatprep.subr.mxu0 0.0
  %283 = vmatpush1.xpose.msra.mxu0 0.0
  %284 = vmatprep.subr.mxu0 0.0
  %285 = vmatpush1.xpose.msra.mxu0 0.0
  %286 = vmatprep.subr.mxu0 0.0
  %287 = vmatpush1.xpose.msra.mxu0 0.0
  %288 = vmatprep.subr.mxu0 0.0
  %289 = vmatpush1.xpose.msra.mxu0 0.0
  %290 = vmatprep.subr.mxu0 0.0
  %291 = vmatpush1.xpose.msra.mxu0 0.0
  %292 = vmatprep.subr.mxu0 0.0
  %293 = vmatpush1.xpose.msra.mxu0 0.0
  %294 = vmatprep.subr.mxu0 0.0
  %295 = vmatpush1.xpose.msra.mxu0 0.0
  %296 = vmatprep.subr.mxu0 0.0
  %297 = vmatpush1.xpose.msra.mxu0 0.0
  %298 = vmatprep.subr.mxu0 0.0
  %299 = vmatpush1.xpose.msra.mxu0 0.0
  %300 = vmatprep.mubr.f32.mxu0 0.0
  %301 = vmatmul.mubr.f32.gmra.mrb[0].mxu0 %v201
  %v302 = vpop.f32.mrb[0].mxu0
  %v303 = vadd.f32 %v181, %v302
  %v304 = vpop.f32.mrb[0].mxu0
  %305 = vmatprep.mubr.f32.mxu0 0.0
  %306 = vmatmul.mubr.f32.gmra.mrb[0].mxu0 %v204
  %v307 = vpop.f32.mrb[0].mxu0
  %v308 = vadd.f32 %v186, %v307
  %v309 = vpop.f32.mrb[0].mxu0
  %310 = vmatprep.mubr.f32.mxu0 0.0
  %311 = vmatmul.mubr.f32.gmra.mrb[0].mxu0 %v207
  %v312 = vpop.f32.mrb[0].mxu0
  %v313 = vadd.f32 %v191, %v312
  %v314 = vpop.f32.mrb[0].mxu0
  %315 = vmatprep.mubr.f32.mxu0 0.0
  %316 = vmatmul.mubr.f32.gmra.mrb[0].mxu0 %v210
  %v317 = vpop.f32.mrb[0].mxu0
  %v318 = vadd.f32 %v196, %v317
  %v319 = vpop.f32.mrb[0].mxu0
  %320 = vdwg.mxu0
  %322 = vset.pattern.permute.xlu0 0
  %323 = vperm.xlu0 %322, %v61
  %v324 = vpop.permute.xlu0 %323
  %327 = vset.pattern.permute.xlu0 0
  %328 = vperm.xlu0 %327, %v62
  %v329 = vpop.permute.xlu0 %328
  %332 = vset.pattern.permute.xlu0 0
  %333 = vperm.xlu0 %332, %v63
  %v334 = vpop.permute.xlu0 %333
  %337 = vset.pattern.permute.xlu0 0
  %338 = vperm.xlu0 %337, %v64
  %v339 = vpop.permute.xlu0 %338
  %v341 = vadd.f32 %v303, %v324
  %v342 = vadd.f32 %v308, %v329
  %v343 = vadd.f32 %v313, %v334
  %v344 = vadd.f32 %v318, %v339
  %v345 = vmax.f32 %v341, 0.0
  %v346 = vmax.f32 %v342, 0.0
  %v347 = vmax.f32 %v343, 0.0
  %v348 = vmax.f32 %v344, 0.0
  %v349 = vld [vmem:[%s4] sm:$0xff]
  %v350 = vld [vmem:[%s4 + $0x8] sm:$0xff]
  %v351 = vld [vmem:[%s4 + $0x10] sm:$0xff]
  %v352 = vld [vmem:[%s4 + $0x18] sm:$0xff]
  %354 = vset.pattern.permute.xlu0 0
  %355 = vperm.xlu0 %354, %v65
  %v356 = vpop.permute.xlu0 %355
  %359 = vset.pattern.permute.xlu0 0
  %360 = vperm.xlu0 %359, %v66
  %v361 = vpop.permute.xlu0 %360
  %364 = vset.pattern.permute.xlu0 0
  %365 = vperm.xlu0 %364, %v67
  %v366 = vpop.permute.xlu0 %365
  %369 = vset.pattern.permute.xlu0 0
  %370 = vperm.xlu0 %369, %v68
  %v371 = vpop.permute.xlu0 %370
  %vm373 = vcmask 261120
  %v375 = vsel %vm373, %v349, 0
  %v378 = vsel %vm373, %v350, 0
  %v381 = vsel %vm373, %v351, 0
  %v384 = vsel %vm373, %v352, 0
  %386 = vmatprep.subr.mxu0 0.0
  %387 = vmatpush1.msra.mxu0 %v345
  %388 = vmatprep.subr.mxu0 0.0
  %389 = vmatpush1.msra.mxu0 %v346
  %390 = vmatprep.subr.mxu0 0.0
  %391 = vmatpush1.msra.mxu0 %v347
  %392 = vmatprep.subr.mxu0 0.0
  %393 = vmatpush1.msra.mxu0 %v348
  %394 = vmatprep.subr.mxu0 0.0
  %395 = vmatpush1.msra.mxu0 0.0
  %396 = vmatprep.subr.mxu0 0.0
  %397 = vmatpush1.msra.mxu0 0.0
  %398 = vmatprep.subr.mxu0 0.0
  %399 = vmatpush1.msra.mxu0 0.0
  %400 = vmatprep.subr.mxu0 0.0
  %401 = vmatpush1.msra.mxu0 0.0
  %402 = vmatprep.subr.mxu0 0.0
  %403 = vmatpush1.msra.mxu0 0.0
  %404 = vmatprep.subr.mxu0 0.0
  %405 = vmatpush1.msra.mxu0 0.0
  %406 = vmatprep.subr.mxu0 0.0
  %407 = vmatpush1.msra.mxu0 0.0
  %408 = vmatprep.subr.mxu0 0.0
  %409 = vmatpush1.msra.mxu0 0.0
  %410 = vmatprep.subr.mxu0 0.0
  %411 = vmatpush1.msra.mxu0 0.0
  %412 = vmatprep.subr.mxu0 0.0
  %413 = vmatpush1.msra.mxu0 0.0
  %414 = vmatprep.subr.mxu0 0.0
  %415 = vmatpush1.msra.mxu0 0.0
  %416 = vmatprep.subr.mxu0 0.0
  %417 = vmatpush1.msra.mxu0 0.0
  %418 = vmatprep.subr.mxu0 0.0
  %419 = vmatpush1.msra.mxu0 0.0
  %420 = vmatprep.subr.mxu0 0.0
  %421 = vmatpush1.msra.mxu0 0.0
  %422 = vmatprep.subr.mxu0 0.0
  %423 = vmatpush1.msra.mxu0 0.0
  %424 = vmatprep.subr.mxu0 0.0
  %425 = vmatpush1.msra.mxu0 0.0
  %426 = vmatprep.subr.mxu0 0.0
  %427 = vmatpush1.msra.mxu0 0.0
  %428 = vmatprep.subr.mxu0 0.0
  %429 = vmatpush1.msra.mxu0 0.0
  %430 = vmatprep.subr.mxu0 0.0
  %431 = vmatpush1.msra.mxu0 0.0
  %432 = vmatprep.subr.mxu0 0.0
  %433 = vmatpush1.msra.mxu0 0.0
  %434 = vmatprep.subr.mxu0 0.0
  %435 = vmatpush1.msra.mxu0 0.0
  %436 = vmatprep.subr.mxu0 0.0
  %437 = vmatpush1.msra.mxu0 0.0
  %438 = vmatprep.subr.mxu0 0.0
  %439 = vmatpush1.msra.mxu0 0.0
  %440 = vmatprep.subr.mxu0 0.0
  %441 = vmatpush1.msra.mxu0 0.0
  %442 = vmatprep.subr.mxu0 0.0
  %443 = vmatpush1.msra.mxu0 0.0
  %444 = vmatprep.subr.mxu0 0.0
  %445 = vmatpush1.msra.mxu0 0.0
  %446 = vmatprep.subr.mxu0 0.0
  %447 = vmatpush1.msra.mxu0 0.0
  %448 = vmatprep.subr.mxu0 0.0
  %449 = vmatpush1.msra.mxu0 0.0
  %450 = vmatprep.mubr.f32.mxu0 0.0
  %451 = vmatmul.mubr.f32.gmra.mrb[0].mxu0 %v375
  %v452 = vpop.f32.mrb[0].mxu0
  %v453 = vadd.f32 %v356, %v452
  %v454 = vpop.f32.mrb[0].mxu0
  %455 = vmatprep.mubr.f32.mxu0 0.0
  %456 = vmatmul.mubr.f32.gmra.mrb[0].mxu0 %v378
  %v457 = vpop.f32.mrb[0].mxu0
  %v458 = vadd.f32 %v361, %v457
  %v459 = vpop.f32.mrb[0].mxu0
  %460 = vmatprep.mubr.f32.mxu0 0.0
  %461 = vmatmul.mubr.f32.gmra.mrb[0].mxu0 %v381
  %v462 = vpop.f32.mrb[0].mxu0
  %v463 = vadd.f32 %v366, %v462
  %v464 = vpop.f32.mrb[0].mxu0
  %465 = vmatprep.mubr.f32.mxu0 0.0
  %466 = vmatmul.mubr.f32.gmra.mrb[0].mxu0 %v384
  %v467 = vpop.f32.mrb[0].mxu0
  %v468 = vadd.f32 %v371, %v467
  %v469 = vpop.f32.mrb[0].mxu0
  %470 = vdwg.mxu0
  %v471 = vmax.f32 %v453, 0.0
  %v472 = vmax.f32 %v458, 0.0
  %v473 = vmax.f32 %v463, 0.0
  %v474 = vmax.f32 %v468, 0.0
  %v475 = vld [vmem:[%s5] sm:$0xff]
  %v476 = vld [vmem:[%s5 + $0x8] sm:$0xff]
  %v477 = vld [vmem:[%s7] sm:$0x1]
  %v479 = vlaneseq
  %v480 = vshrl.u32 %v479, 7
  %v481 = vsub.s32 0, %v480
  %v482 = vrot.slane %v477, %v481
  %484 = vxpose.xlu0.b32.start [1/16] %v471, 128
  %485 = vxpose.xlu0.b32.cont [2/16] %v472, 128
  %486 = vxpose.xlu0.b32.cont [3/16] %v473, 128
  %487 = vxpose.xlu0.b32.cont [4/16] %v474, 128
  %488 = vxpose.xlu0.b32.cont [5/16] 0.0, 128
  %489 = vxpose.xlu0.b32.cont [6/16] 0.0, 128
  %490 = vxpose.xlu0.b32.cont [7/16] 0.0, 128
  %491 = vxpose.xlu0.b32.cont [8/16] 0.0, 128
  %492 = vxpose.xlu0.b32.cont [9/16] 0.0, 128
  %493 = vxpose.xlu0.b32.cont [10/16] 0.0, 128
  %494 = vxpose.xlu0.b32.cont [11/16] 0.0, 128
  %495 = vxpose.xlu0.b32.cont [12/16] 0.0, 128
  %496 = vxpose.xlu0.b32.cont [13/16] 0.0, 128
  %497 = vxpose.xlu0.b32.cont [14/16] 0.0, 128
  %498 = vxpose.xlu0.b32.cont [15/16] 0.0, 128
  %499 = vxpose.xlu0.b32.end [16/16] 0.0, 128
  %v500 = vpop.trf.xlu0
  %v501 = vpop.trf.xlu0
  %v502 = vpop.trf.xlu0
  %v503 = vpop.trf.xlu0
  %v504 = vpop.trf.xlu0
  %v505 = vpop.trf.xlu0
  %v506 = vpop.trf.xlu0
  %v507 = vpop.trf.xlu0
  %v508 = vpop.trf.xlu0
  %v509 = vpop.trf.xlu0
  %v510 = vpop.trf.xlu0
  %v511 = vpop.trf.xlu0
  %v512 = vpop.trf.xlu0
  %v513 = vpop.trf.xlu0
  %v514 = vpop.trf.xlu0
  %v515 = vpop.trf.xlu0
  %v517 = vsel %vm373, %v500, 0
  %v520 = vsel %vm373, %v501, 0
  %v523 = vsel %vm373, %v502, 0
  %v526 = vsel %vm373, %v503, 0
  %v529 = vsel %vm373, %v504, 0
  %v532 = vsel %vm373, %v505, 0
  %v535 = vsel %vm373, %v506, 0
  %v538 = vsel %vm373, %v507, 0
  %v541 = vsel %vm373, %v475, 0
  %v544 = vsel %vm373, %v476, 0
  %546 = vmatprep.subr.mxu0 0.0
  %547 = vmatpush1.xpose.msra.mxu0 %v541
  %548 = vmatprep.subr.mxu0 0.0
  %549 = vmatpush1.xpose.msra.mxu0 %v544
  %550 = vmatprep.subr.mxu0 0.0
  %551 = vmatpush1.xpose.msra.mxu0 0.0
  %552 = vmatprep.subr.mxu0 0.0
  %553 = vmatpush1.xpose.msra.mxu0 0.0
  %554 = vmatprep.subr.mxu0 0.0
  %555 = vmatpush1.xpose.msra.mxu0 0.0
  %556 = vmatprep.subr.mxu0 0.0
  %557 = vmatpush1.xpose.msra.mxu0 0.0
  %558 = vmatprep.subr.mxu0 0.0
  %559 = vmatpush1.xpose.msra.mxu0 0.0
  %560 = vmatprep.subr.mxu0 0.0
  %561 = vmatpush1.xpose.msra.mxu0 0.0
  %562 = vmatprep.subr.mxu0 0.0
  %563 = vmatpush1.xpose.msra.mxu0 0.0
  %564 = vmatprep.subr.mxu0 0.0
  %565 = vmatpush1.xpose.msra.mxu0 0.0
  %566 = vmatprep.subr.mxu0 0.0
  %567 = vmatpush1.xpose.msra.mxu0 0.0
  %568 = vmatprep.subr.mxu0 0.0
  %569 = vmatpush1.xpose.msra.mxu0 0.0
  %570 = vmatprep.subr.mxu0 0.0
  %571 = vmatpush1.xpose.msra.mxu0 0.0
  %572 = vmatprep.subr.mxu0 0.0
  %573 = vmatpush1.xpose.msra.mxu0 0.0
  %574 = vmatprep.subr.mxu0 0.0
  %575 = vmatpush1.xpose.msra.mxu0 0.0
  %576 = vmatprep.subr.mxu0 0.0
  %577 = vmatpush1.xpose.msra.mxu0 0.0
  %578 = vmatprep.subr.mxu0 0.0
  %579 = vmatpush1.xpose.msra.mxu0 0.0
  %580 = vmatprep.subr.mxu0 0.0
  %581 = vmatpush1.xpose.msra.mxu0 0.0
  %582 = vmatprep.subr.mxu0 0.0
  %583 = vmatpush1.xpose.msra.mxu0 0.0
  %584 = vmatprep.subr.mxu0 0.0
  %585 = vmatpush1.xpose.msra.mxu0 0.0
  %586 = vmatprep.subr.mxu0 0.0
  %587 = vmatpush1.xpose.msra.mxu0 0.0
  %588 = vmatprep.subr.mxu0 0.0
  %589 = vmatpush1.xpose.msra.mxu0 0.0
  %590 = vmatprep.subr.mxu0 0.0
  %591 = vmatpush1.xpose.msra.mxu0 0.0
  %592 = vmatprep.subr.mxu0 0.0
  %593 = vmatpush1.xpose.msra.mxu0 0.0
  %594 = vmatprep.subr.mxu0 0.0
  %595 = vmatpush1.xpose.msra.mxu0 0.0
  %596 = vmatprep.subr.mxu0 0.0
  %597 = vmatpush1.xpose.msra.mxu0 0.0
  %598 = vmatprep.subr.mxu0 0.0
  %599 = vmatpush1.xpose.msra.mxu0 0.0
  %600 = vmatprep.subr.mxu0 0.0
  %601 = vmatpush1.xpose.msra.mxu0 0.0
  %602 = vmatprep.subr.mxu0 0.0
  %603 = vmatpush1.xpose.msra.mxu0 0.0
  %604 = vmatprep.subr.mxu0 0.0
  %605 = vmatpush1.xpose.msra.mxu0 0.0
  %606 = vmatprep.subr.mxu0 0.0
  %607 = vmatpush1.xpose.msra.mxu0 0.0
  %608 = vmatprep.subr.mxu0 0.0
  %609 = vmatpush1.xpose.msra.mxu0 0.0
  %610 = vmatprep.mubr.f32.mxu0 0.0
  %611 = vmatmul.mubr.f32.gmra.mrb[0].mxu0 %v517
  %v612 = vpop.f32.mrb[0].mxu0
  %v613 = vadd.f32 %v482, %v612
  %v614 = vpop.f32.mrb[0].mxu0
  %615 = vmatprep.mubr.f32.mxu0 0.0
  %616 = vmatmul.mubr.f32.gmra.mrb[0].mxu0 %v520
  %v617 = vpop.f32.mrb[0].mxu0
  %v618 = vadd.f32 %v482, %v617
  %v619 = vpop.f32.mrb[0].mxu0
  %620 = vmatprep.mubr.f32.mxu0 0.0
  %621 = vmatmul.mubr.f32.gmra.mrb[0].mxu0 %v523
  %v622 = vpop.f32.mrb[0].mxu0
  %v623 = vadd.f32 %v482, %v622
  %v624 = vpop.f32.mrb[0].mxu0
  %625 = vmatprep.mubr.f32.mxu0 0.0
  %626 = vmatmul.mubr.f32.gmra.mrb[0].mxu0 %v526
  %v627 = vpop.f32.mrb[0].mxu0
  %v628 = vadd.f32 %v482, %v627
  %v629 = vpop.f32.mrb[0].mxu0
  %630 = vmatprep.mubr.f32.mxu0 0.0
  %631 = vmatmul.mubr.f32.gmra.mrb[0].mxu0 %v529
  %v632 = vpop.f32.mrb[0].mxu0
  %v633 = vadd.f32 %v482, %v632
  %v634 = vpop.f32.mrb[0].mxu0
  %635 = vmatprep.mubr.f32.mxu0 0.0
  %636 = vmatmul.mubr.f32.gmra.mrb[0].mxu0 %v532
  %v637 = vpop.f32.mrb[0].mxu0
  %v638 = vadd.f32 %v482, %v637
  %v639 = vpop.f32.mrb[0].mxu0
  %640 = vmatprep.mubr.f32.mxu0 0.0
  %641 = vmatmul.mubr.f32.gmra.mrb[0].mxu0 %v535
  %v642 = vpop.f32.mrb[0].mxu0
  %v643 = vadd.f32 %v482, %v642
  %v644 = vpop.f32.mrb[0].mxu0
  %645 = vmatprep.mubr.f32.mxu0 0.0
  %646 = vmatmul.mubr.f32.gmra.mrb[0].mxu0 %v538
  %v647 = vpop.f32.mrb[0].mxu0
  %v648 = vadd.f32 %v482, %v647
  %v649 = vpop.f32.mrb[0].mxu0
  %650 = vdwg.mxu0
  %v651 = vadd.f32 %v29, %v613
  %v652 = vadd.f32 %v30, %v618
  %v653 = vadd.f32 %v31, %v623
  %v654 = vadd.f32 %v32, %v628
  %v655 = vadd.f32 %v33, %v633
  %v656 = vadd.f32 %v34, %v638
  %v657 = vadd.f32 %v35, %v643
  %v658 = vadd.f32 %v36, %v648
  %v659 = vmax.f32 %v651, -100.0
  %v660 = vmax.f32 %v652, -100.0
  %v661 = vmax.f32 %v653, -100.0
  %v662 = vmax.f32 %v654, -100.0
  %v663 = vmax.f32 %v655, -100.0
  %v664 = vmax.f32 %v656, -100.0
  %v665 = vmax.f32 %v657, -100.0
  %v666 = vmax.f32 %v658, -100.0
  %v667 = vmin.f32 %v659, 100.0
  %v668 = vmin.f32 %v660, 100.0
  %v669 = vmin.f32 %v661, 100.0
  %v670 = vmin.f32 %v662, 100.0
  %v671 = vmin.f32 %v663, 100.0
  %v672 = vmin.f32 %v664, 100.0
  %v673 = vmin.f32 %v665, 100.0
  %v674 = vmin.f32 %v666, 100.0
  %675 = vst.msk [vmem:[%s8] sm:$0xff] %vm199, %v667
  %676 = vst.msk [vmem:[%s8 + $0x8] sm:$0xff] %vm199, %v668
  %677 = vst.msk [vmem:[%s8 + $0x10] sm:$0xff] %vm199, %v669
  %678 = vst.msk [vmem:[%s8 + $0x18] sm:$0xff] %vm199, %v670
  %679 = vst.msk [vmem:[%s8 + $0x20] sm:$0xff] %vm199, %v671
  %680 = vst.msk [vmem:[%s8 + $0x28] sm:$0xff] %vm199, %v672
  %681 = vst.msk [vmem:[%s8 + $0x30] sm:$0xff] %vm199, %v673
  %682 = vst.msk [vmem:[%s8 + $0x38] sm:$0xff] %vm199, %v674
  // Predicated region
  $region34: #{tpu_custom_call.1} parent=0 // pred_check
    _
  $region35: #{tpu_custom_call.1} parent=0 // pred_check_branch
    %684 = sbr.rel (0) target = $region37
  $region36: #{tpu_custom_call.1} parent=0 // pred_region
    _
  $region37: #{tpu_custom_call.1} parent=0 // pred_fallthru
    _
  // Predicated region
  $region38: #{tpu_custom_call.1} parent=0 // pred_check
    _
  $region39: #{tpu_custom_call.1} parent=0 // pred_check_branch
    %686 = sbr.rel (0) target = $region41
  $region40: #{tpu_custom_call.1} parent=0 // pred_region
    _
  $region41: #{tpu_custom_call.1} parent=0 // pred_fallthru
    _

</llo_original>
